<compile_context>
chip_gen: v5e
topology: v5e:2x2
jax: 0.10.0
libtpu: 0.0.40
codegen_flags: <defaults>
</compile_context>

<pallas_src>
import math
import functools

import jax
import jax.numpy as jnp
from jax.experimental import pallas as pl
from jax.experimental.pallas import tpu as pltpu


def _round_up(x, a):
    return ((x + a - 1) // a) * a


# ---------------------------------------------------------------------------
# Kernel bodies
# ---------------------------------------------------------------------------
def _proj_kernel_nk1(x_ref, w_ref, b_ref, o_ref):
    """Fast path (nk == 1): whole d_model reduction in one k-tile.

    No f32 accumulator scratch: dot -> bias add in f32 -> cast -> one lane-dense store.
    """
    acc = jnp.dot(x_ref[...], w_ref[...], preferred_element_type=jnp.float32)
    o_ref[...] = (acc + b_ref[...].astype(jnp.float32)).astype(o_ref.dtype)


def _proj_kernel_acc(x_ref, w_ref, b_ref, o_ref, acc_ref):
    """General path: k (d_model reduction) is the innermost grid axis (axis 2)."""
    @pl.when(pl.program_id(2) == 0)
    def _():
        acc_ref[...] = jnp.zeros_like(acc_ref)

    acc_ref[...] += jnp.dot(
        x_ref[...], w_ref[...], preferred_element_type=jnp.float32
    )

    @pl.when(pl.program_id(2) == pl.num_programs(2) - 1)
    def _():
        o_ref[...] = (acc_ref[...] + b_ref[...].astype(jnp.float32)).astype(o_ref.dtype)


# ---------------------------------------------------------------------------
# Trace-time tile / budget helpers
# ---------------------------------------------------------------------------
def _vmem_limit_bytes():
    """Scoped VMEM limit: 75% of physical (≈96 MiB on v5e/v6e, ≈48 MiB on v7x)."""
    try:
        cap = pltpu.get_tpu_info().vmem_capacity_bytes
    except Exception:  # older jax or non-TPU introspection failure
        cap = 64 * 1024 * 1024
    return int(cap * 0.75)


def _choose_tiles(M, D, V, in_itemsize, out_itemsize, tm, tn, tk, budget, sub):
    """Pick (tm, tn, tk) whose double-buffered working set fits `budget`.

    Shrink order (perf feedback): reduce tm/tn BEFORE tk. Keeping tk == D (nk == 1)
    preserves weight residency in the weight-resident grid order; splitting K is the
    last resort because it multiplies weight HBM traffic by M/tm.
    """
    tm = max(sub, _round_up(min(tm, M), sub))
    tn = max(128, _round_up(min(tn, V), 128))
    tk = D if (tk is None or tk >= D) else max(128, (tk // 128) * 128)

    for _ in range(64):
        split_k = tk < D
        need = (
            2 * (tm * tk + tk * tn + tn) * in_itemsize   # double-buffered x, W, bias
            + 2 * tm * tn * out_itemsize                 # double-buffered output
            + (tm * tn * 4 if split_k else 0)            # f32 accumulator (K-split only)
        )
        if need <= budget:
            break
        if tm > 128:
            tm = max(128, _round_up(tm // 2, sub))
        elif tn > 256:
            tn = max(256, _round_up(tn // 2, 128))
        elif tm > sub:
            tm = max(sub, _round_up(tm // 2, sub))
        elif tn > 128:
            tn = 128
        elif tk > 128:
            # Last resort: split the d_model reduction (re-streams W per row-tile).
            tk = max(128, _round_up(max(1, tk // 2), 128))
        else:
            break
    return tm, tn, tk


# ---------------------------------------------------------------------------
# Public wrapper
# ---------------------------------------------------------------------------
@functools.partial(jax.jit, static_argnames=("tm", "tn", "tk", "compute_dtype"))
def projection_layer(x, w_t, b, *, tm=256, tn=1024, tk=None, compute_dtype=None):
    """x: (B, S, D); w_t: (D, V) == W.T; b: (V,).  Returns (B, S, V).

    compute_dtype: optionally cast x/W to a narrower MXU dtype (e.g. jnp.bfloat16);
    accumulation and bias add stay in f32. Accuracy-affecting, off by default.
    """
    B, S, D = x.shape
    Dw, V = w_t.shape
    assert Dw == D
    M = B * S

    out_dtype = x.dtype
    out_itemsize = jnp.dtype(out_dtype).itemsize
    in_dtype = jnp.dtype(compute_dtype) if compute_dtype is not None else jnp.dtype(x.dtype)
    in_itemsize = in_dtype.itemsize
    sub = 8 * max(1, 4 // in_itemsize)  # sublane multiple: f32->8, bf16->16, int8->32

    vmem_limit = _vmem_limit_bytes()
    budget = int(vmem_limit * 0.8)      # headroom for Mosaic internal scratch (v7x!)

    tm, tn, tk = _choose_tiles(M, D, V, in_itemsize, out_itemsize,
                               tm, tn, tk, budget, sub)

    # Pad to tile multiples (zero padding -> zero contribution / sliced-off columns).
    Mp = _round_up(M, tm)
    Vp = _round_up(V, tn)
    Dp = D if tk >= D else _round_up(D, tk)
    if tk >= D:
        tk = Dp

    ni, nj, nk = Mp // tm, Vp // tn, Dp // tk

    # ---- grid-order selection: minimize re-streamed HBM bytes -----------------
    x_bytes = Mp * Dp * in_itemsize
    w_bytes = Dp * Vp * in_itemsize
    # weight-resident order (j, i, k): W streamed once when nk==1, x streamed nj times.
    traffic_w_res = nj * x_bytes + (w_bytes if nk == 1 else ni * w_bytes)
    # x-resident order (i, j, k): x streamed once when nk==1, W streamed ni times.
    traffic_x_res = (x_bytes if nk == 1 else nj * x_bytes) + ni * w_bytes
    weight_resident = traffic_w_res <= traffic_x_res

    if weight_resident:
        grid = (nj, ni, nk)
        x_map = lambda j, i, k: (i, k)
        w_map = lambda j, i, k: (k, j)
        b_map = lambda j, i, k: (0, j)
        o_map = lambda j, i, k: (i, j)
    else:
        grid = (ni, nj, nk)
        x_map = lambda i, j, k: (i, k)
        w_map = lambda i, j, k: (k, j)
        b_map = lambda i, j, k: (0, j)
        o_map = lambda i, j, k: (i, j)

    if nk == 1:
        kernel = _proj_kernel_nk1
        scratch = []
    else:
        kernel = _proj_kernel_acc
        scratch = [pltpu.VMEM((tm, tn), jnp.float32)]

    # ---- prepare (cast / pad) operands ----------------------------------------
    x2d = x.reshape(M, D)
    w2d = w_t
    if compute_dtype is not None:
        x2d = x2d.astype(compute_dtype)
        w2d = w2d.astype(compute_dtype)
    if (Mp, Dp) != (M, D):
        x2d = jnp.pad(x2d, ((0, Mp - M), (0, Dp - D)))
    if (Dp, Vp) != (D, V):
        w2d = jnp.pad(w2d, ((0, Dp - D), (0, Vp - V)))
    b2d = b.reshape(1, V)
    if Vp != V:
        b2d = jnp.pad(b2d, ((0, 0), (0, Vp - V)))

    # Advisory cost: reflect the *actual* re-streamed traffic, not the ideal count.
    bytes_accessed = int(min(traffic_w_res, traffic_x_res)
                         + Mp * Vp * out_itemsize
                         + Vp * jnp.dtype(b.dtype).itemsize)
    cost = pl.CostEstimate(flops=2 * Mp * Dp * Vp, transcendentals=0,
                           bytes_accessed=bytes_accessed)

    out2d = pl.pallas_call(
        kernel,
        out_shape=jax.ShapeDtypeStruct((Mp, Vp), out_dtype),
        grid_spec=pltpu.PrefetchScalarGridSpec(
            num_scalar_prefetch=0,
            grid=grid,
            in_specs=[
                pl.BlockSpec((tm, tk), x_map),   # x tile
                pl.BlockSpec((tk, tn), w_map),   # W.T tile
                pl.BlockSpec((1, tn), b_map),    # bias tile
            ],
            out_specs=pl.BlockSpec((tm, tn), o_map),
            scratch_shapes=scratch,
        ),
        compiler_params=pltpu.CompilerParams(
            # Only the outermost axis is marked parallel. In the weight-resident order
            # that is the vocab axis, so a v7x megacore split shards W (total weight
            # traffic stays at D*V) instead of streaming it twice.
            dimension_semantics=("parallel", "arbitrary", "arbitrary"),
            vmem_limit_bytes=vmem_limit,
        ),
        cost_estimate=cost,
    )(x2d, w2d, b2d)

    out2d = out2d[:M, :V]
    return out2d.reshape(B, S, V)


def init_projection_params(key, d_model, vocab_size, dtype=jnp.float32):
    """Deterministic init mimicking torch.nn.Linear defaults (uniform ±1/sqrt(d_model))."""
    kw, kb = jax.random.split(key)
    bound = 1.0 / math.sqrt(d_model)
    # PyTorch stores weight as (vocab_size, d_model); we keep the transpose (d_model, vocab).
    w = jax.random.uniform(kw, (vocab_size, d_model), dtype, -bound, bound)
    b = jax.random.uniform(kb, (vocab_size,), dtype, -bound, bound)
    return w.T, b


if __name__ == "__main__":
    key = jax.random.PRNGKey(0)
    k_x, k_p = jax.random.split(key)

    batch, seq, d_model, vocab_size = 2, 8, 256, 512
    x = jax.random.normal(k_x, (batch, seq, d_model), jnp.float32)
    w_t, b = init_projection_params(k_p, d_model, vocab_size)
    ref = x @ w_t + b

    # 1) Default tiling: nk == 1 fast path, trace-time grid-order selection.
    out = jax.block_until_ready(projection_layer(x, w_t, b))
    assert out.shape == (batch, seq, vocab_size)
    assert jnp.allclose(out, ref, atol=1e-3, rtol=1e-3)

    # 2) Explicit small tiles: exercises the K-split accumulator kernel
    #    (pl.when init/finalize, f32 VMEM scratch).
    out_acc = jax.block_until_ready(projection_layer(x, w_t, b, tm=8, tn=128, tk=128))
    assert jnp.allclose(out_acc, ref, atol=1e-3, rtol=1e-3)

    # 3) Non-128-multiple vocab and odd row count: exercises the padding path
    #    (lane-dense padded tiles, sliced back afterwards).
    vocab_odd = 500
    w_t2, b2 = init_projection_params(k_p, d_model, vocab_odd)
    x2 = jax.random.normal(k_x, (2, 7, d_model), jnp.float32)
    ref2 = x2 @ w_t2 + b2
    out2 = jax.block_until_ready(projection_layer(x2, w_t2, b2))
    assert out2.shape == (2, 7, vocab_odd)
    assert jnp.allclose(out2, ref2, atol=1e-3, rtol=1e-3)

    # 4) Optional bf16 MXU compute mode (f32 accumulation); accuracy-affecting.
    out_bf16 = jax.block_until_ready(
        projection_layer(x, w_t, b, compute_dtype=jnp.bfloat16))
    assert jnp.allclose(out_bf16, ref, atol=1.5e-1, rtol=1e-1)

    print("KERNEL_OK")
</pallas_src>

<mosaic_0001>
module attributes {stable_mosaic.version = 11 : i64} {
  func.func @_proj_kernel_nk1(%arg0: i32, %arg1: i32, %arg2: i32, %arg3: memref<16x256xf32, #tpu.memory_space<vmem>>, %arg4: memref<256x512xf32, #tpu.memory_space<vmem>>, %arg5: memref<1x512xf32, #tpu.memory_space<vmem>>, %arg6: memref<16x512xf32, #tpu.memory_space<vmem>>) attributes {dimension_semantics = [#tpu.dimension_semantics<parallel>, #tpu.dimension_semantics<arbitrary>, #tpu.dimension_semantics<arbitrary>], iteration_bounds = array<i64: 1, 1, 1>, scalar_prefetch = 0 : i64, scratch_operands = 0 : i64, tpu.core_type = #tpu.core_type<tc>, window_params = [{transform_indices = @transform_0, window_bounds = array<i64: 16, 256>}, {transform_indices = @transform_1, window_bounds = array<i64: 256, 512>}, {transform_indices = @transform_2, window_bounds = array<i64: 1, 512>}, {transform_indices = @transform_3, window_bounds = array<i64: 16, 512>}]} {
    %c0 = arith.constant 0 : index
    %c0_0 = arith.constant 0 : index
    %0 = vector.load %arg3[%c0, %c0_0] : memref<16x256xf32, #tpu.memory_space<vmem>>, vector<16x256xf32>
    %c0_1 = arith.constant 0 : index
    %c0_2 = arith.constant 0 : index
    %1 = vector.load %arg4[%c0_1, %c0_2] : memref<256x512xf32, #tpu.memory_space<vmem>>, vector<256x512xf32>
    %cst = arith.constant dense<0.000000e+00> : vector<16x512xf32>
    %2 = tpu.matmul %0, %1, %cst {dimension_numbers = #tpu.dot_dimension_numbers<[1], [0], [0], [1], [0, 0, 1, 1], [], []>} : vector<16x256xf32>, vector<256x512xf32>, vector<16x512xf32> -> vector<16x512xf32>
    %c0_3 = arith.constant 0 : index
    %c0_4 = arith.constant 0 : index
    %3 = vector.load %arg5[%c0_3, %c0_4] : memref<1x512xf32, #tpu.memory_space<vmem>>, vector<1x512xf32>
    %4 = vector.broadcast %3 : vector<1x512xf32> to vector<16x512xf32>
    %5 = arith.addf %2, %4 : vector<16x512xf32>
    %c0_5 = arith.constant 0 : index
    %c0_6 = arith.constant 0 : index
    %6 = vector.load %arg6[%c0_5, %c0_6] : memref<16x512xf32, #tpu.memory_space<vmem>>, vector<16x512xf32>
    tpu.vector_store %arg6[%c0_5, %c0_6], %5 {strides = array<i32>} : memref<16x512xf32, #tpu.memory_space<vmem>>, vector<16x512xf32>,
    return
  }
  func.func @transform_0(%arg0: i32, %arg1: i32, %arg2: i32) -> (i32, i32) {
    %c0_i32 = arith.constant 0 : i32
    return %arg1, %arg2 : i32, i32
  }
  func.func @transform_1(%arg0: i32, %arg1: i32, %arg2: i32) -> (i32, i32) {
    %c0_i32 = arith.constant 0 : i32
    return %arg2, %arg0 : i32, i32
  }
  func.func @transform_2(%arg0: i32, %arg1: i32, %arg2: i32) -> (i32, i32) {
    %c0_i32 = arith.constant 0 : i32
    %c0_i32_0 = arith.constant 0 : i32
    return %c0_i32, %arg0 : i32, i32
  }
  func.func @transform_3(%arg0: i32, %arg1: i32, %arg2: i32) -> (i32, i32) {
    %c0_i32 = arith.constant 0 : i32
    return %arg1, %arg0 : i32, i32
  }
}

</mosaic_0001>

<llo_original>
// kernel: projection_layer.1
$region0: #{projection_layer.1}
  #allocation0 [shape = 'u32[]', space=smem, size = 0x4, offset = 0x4, fixed_abs, tag = 'smem constant byte address 0x4 - core index']
  #allocation1 [shape = 'u32[72,128]{1,0:T(1,128)}', space=vmem, size = 0x9000, scoped, tag = 'internal scratch']
  %s0 = inlined_call_operand.hbm [shape: f32[16,256], index: 0, kind: input, shape index: {}]
  %s1 = inlined_call_operand.hbm [shape: f32[256,512], index: 1, kind: input, shape index: {}]
  %s2 = inlined_call_operand.hbm [shape: f32[1,512], index: 2, kind: input, shape index: {}]
  %s3 = inlined_call_operand.hbm [shape: f32[16,512], index: 3, kind: output, shape index: {}]
  %s4 = sld [smem:[#allocation0]]
  $region34: #{projection_layer.1} parent=0
    _
  %s6 = ssub.s32 1, %s4
  %s7 = scalar_select 0, %s6, %s4
  $region1: #{projection_layer.1} parent=0
    #allocation2 [shape = 'u8[16384]{0}', space=vmem, size = 0x4000, scoped, tag = 'input window, operand 0, single buffered']
    #allocation3 [shape = 's32[1]{0}', space=sflag, size = 0x4, scoped, tag = 'scoped memory for projection_layer.1']
    #allocation4 [shape = 's32[1]{0}', space=sflag, size = 0x4, scoped, tag = 'scoped memory for projection_layer.1']
    #allocation5 [shape = 'u8[524288]{0}', space=vmem, size = 0x80000, scoped, tag = 'input window, operand 1, single buffered']
    #allocation6 [shape = 's32[1]{0}', space=sflag, size = 0x4, scoped, tag = 'scoped memory for projection_layer.1']
    #allocation7 [shape = 'u8[2048]{0}', space=vmem, size = 0x800, scoped, tag = 'input window, operand 2, single buffered']
    #allocation8 [shape = 'u8[32768]{0}', space=vmem, size = 0x8000, scoped, tag = 'output window, operand 0, single buffered']
    %8 = vsyncpa [#allocation3], 0
    %9 = vsyncpa [#allocation6], 0
    %10 = vsyncpa [#allocation4], 0
    // Predicated region
    $region2: #{projection_layer.1} parent=1 // pred_check
      _
    $region3: #{projection_layer.1} parent=1 // pred_check_branch
      %12 = sbr.rel (0) target = $region5
    $region4: #{projection_layer.1} parent=1 // pred_region
      %14 = vsyncadd [#allocation3], 0
      %s15 = sshll.u32 %s0, 4
      %s16 = int_to_ptr.hbm [resolvable:$true] %s15
      %s17 = sshll.u32 [#allocation2], 4
      %s18 = int_to_ptr.vmem [resolvable:$true] %s17
      %23 = dma.hbm_to_vmem [thread:$0]  %s16, 512, %s18, [#allocation3], 256, 256, 16
    $region5: #{projection_layer.1} parent=1 // pred_fallthru
      _
    // Predicated region
    $region6: #{projection_layer.1} parent=1 // pred_check
      _
    $region7: #{projection_layer.1} parent=1 // pred_check_branch
      %25 = sbr.rel (0) target = $region9
    $region8: #{projection_layer.1} parent=1 // pred_region
      %27 = vsyncadd [#allocation6], 0
      %s28 = sshll.u32 %s1, 4
      %s29 = int_to_ptr.hbm [resolvable:$true] %s28
      %s30 = sshll.u32 [#allocation5], 4
      %s31 = int_to_ptr.vmem [resolvable:$true] %s30
      %36 = dma.hbm_to_vmem [thread:$0]  %s29, 16384, %s31, [#allocation6], 512, 512, 32
    $region9: #{projection_layer.1} parent=1 // pred_fallthru
      _
    // Predicated region
    $region10: #{projection_layer.1} parent=1 // pred_check
      _
    $region11: #{projection_layer.1} parent=1 // pred_check_branch
      %38 = sbr.rel (0) target = $region13
    $region12: #{projection_layer.1} parent=1 // pred_region
      %40 = vsyncadd [#allocation6], 0
      %s42 = sshll.u32 %s2, 4
      %s43 = int_to_ptr.hbm [resolvable:$true] %s42
      %s44 = sshll.u32 [#allocation7], 4
      %s45 = int_to_ptr.vmem [resolvable:$true] %s44
      %47 = dma.hbm_to_vmem [thread:$0]  %s43, 64, %s45, [#allocation6]
    $region13: #{projection_layer.1} parent=1 // pred_fallthru
      _
    // Predicated region
    $region14: #{projection_layer.1} parent=1 // pred_check
      _
    $region15: #{projection_layer.1} parent=1 // pred_check_branch
      %49 = sbr.rel (0) target = $region17
    $region16: #{projection_layer.1} parent=1 // pred_region
      %51 = dma.done [#allocation3], 512
    $region17: #{projection_layer.1} parent=1 // pred_fallthru
      _
    // Predicated region
    $region18: #{projection_layer.1} parent=1 // pred_check
      _
    $region19: #{projection_layer.1} parent=1 // pred_check_branch
      %53 = sbr.rel (0) target = $region21
    $region20: #{projection_layer.1} parent=1 // pred_region
      %55 = dma.done [#allocation6], 16384
    $region21: #{projection_layer.1} parent=1 // pred_fallthru
      _
    // Predicated region
    $region22: #{projection_layer.1} parent=1 // pred_check
      _
    $region23: #{projection_layer.1} parent=1 // pred_check_branch
      %57 = sbr.rel (0) target = $region25
    $region24: #{projection_layer.1} parent=1 // pred_region
      %59 = dma.done [#allocation6], 64
    $region25: #{projection_layer.1} parent=1 // pred_fallthru
      _
    %v60 = vld [vmem:[#allocation2] sm:$0xff]
    %v61 = vld [vmem:[#allocation2 + $0x8] sm:$0xff]
    %v62 = vld [vmem:[#allocation2 + $0x10] sm:$0xff]
    %v63 = vld [vmem:[#allocation2 + $0x18] sm:$0xff]
    %v64 = vld [vmem:[#allocation5] sm:$0xff]
    %v65 = vld [vmem:[#allocation5 + $0x8] sm:$0xff]
    %v66 = vld [vmem:[#allocation5 + $0x10] sm:$0xff]
    %v67 = vld [vmem:[#allocation5 + $0x18] sm:$0xff]
    %v68 = vld [vmem:[#allocation5 + $0x20] sm:$0xff]
    %v69 = vld [vmem:[#allocation5 + $0x28] sm:$0xff]
    %v70 = vld [vmem:[#allocation5 + $0x30] sm:$0xff]
    %v71 = vld [vmem:[#allocation5 + $0x38] sm:$0xff]
    %v72 = vld [vmem:[#allocation5 + $0x40] sm:$0xff]
    %v73 = vld [vmem:[#allocation5 + $0x48] sm:$0xff]
    %v74 = vld [vmem:[#allocation5 + $0x50] sm:$0xff]
    %v75 = vld [vmem:[#allocation5 + $0x58] sm:$0xff]
    %v76 = vld [vmem:[#allocation5 + $0x60] sm:$0xff]
    %v77 = vld [vmem:[#allocation5 + $0x68] sm:$0xff]
    %v78 = vld [vmem:[#allocation5 + $0x70] sm:$0xff]
    %v79 = vld [vmem:[#allocation5 + $0x78] sm:$0xff]
    %v80 = vld [vmem:[#allocation5 + $0x80] sm:$0xff]
    %v81 = vld [vmem:[#allocation5 + $0x88] sm:$0xff]
    %v82 = vld [vmem:[#allocation5 + $0x90] sm:$0xff]
    %v83 = vld [vmem:[#allocation5 + $0x98] sm:$0xff]
    %v84 = vld [vmem:[#allocation5 + $0xa0] sm:$0xff]
    %v85 = vld [vmem:[#allocation5 + $0xa8] sm:$0xff]
    %v86 = vld [vmem:[#allocation5 + $0xb0] sm:$0xff]
    %v87 = vld [vmem:[#allocation5 + $0xb8] sm:$0xff]
    %v88 = vld [vmem:[#allocation5 + $0xc0] sm:$0xff]
    %v89 = vld [vmem:[#allocation5 + $0xc8] sm:$0xff]
    %v90 = vld [vmem:[#allocation5 + $0xd0] sm:$0xff]
    %v91 = vld [vmem:[#allocation5 + $0xd8] sm:$0xff]
    %v92 = vld [vmem:[#allocation5 + $0xe0] sm:$0xff]
    %v93 = vld [vmem:[#allocation5 + $0xe8] sm:$0xff]
    %v94 = vld [vmem:[#allocation5 + $0xf0] sm:$0xff]
    %v95 = vld [vmem:[#allocation5 + $0xf8] sm:$0xff]
    %v96 = vld [vmem:[#allocation5 + $0x100] sm:$0xff]
    %v97 = vld [vmem:[#allocation5 + $0x108] sm:$0xff]
    %v98 = vld [vmem:[#allocation5 + $0x110] sm:$0xff]
    %v99 = vld [vmem:[#allocation5 + $0x118] sm:$0xff]
    %v100 = vld [vmem:[#allocation5 + $0x120] sm:$0xff]
    %v101 = vld [vmem:[#allocation5 + $0x128] sm:$0xff]
    %v102 = vld [vmem:[#allocation5 + $0x130] sm:$0xff]
    %v103 = vld [vmem:[#allocation5 + $0x138] sm:$0xff]
    %v104 = vld [vmem:[#allocation5 + $0x140] sm:$0xff]
    %v105 = vld [vmem:[#allocation5 + $0x148] sm:$0xff]
    %v106 = vld [vmem:[#allocation5 + $0x150] sm:$0xff]
    %v107 = vld [vmem:[#allocation5 + $0x158] sm:$0xff]
    %v108 = vld [vmem:[#allocation5 + $0x160] sm:$0xff]
    %v109 = vld [vmem:[#allocation5 + $0x168] sm:$0xff]
    %v110 = vld [vmem:[#allocation5 + $0x170] sm:$0xff]
    %v111 = vld [vmem:[#allocation5 + $0x178] sm:$0xff]
    %v112 = vld [vmem:[#allocation5 + $0x180] sm:$0xff]
    %v113 = vld [vmem:[#allocation5 + $0x188] sm:$0xff]
    %v114 = vld [vmem:[#allocation5 + $0x190] sm:$0xff]
    %v115 = vld [vmem:[#allocation5 + $0x198] sm:$0xff]
    %v116 = vld [vmem:[#allocation5 + $0x1a0] sm:$0xff]
    %v117 = vld [vmem:[#allocation5 + $0x1a8] sm:$0xff]
    %v118 = vld [vmem:[#allocation5 + $0x1b0] sm:$0xff]
    %v119 = vld [vmem:[#allocation5 + $0x1b8] sm:$0xff]
    %v120 = vld [vmem:[#allocation5 + $0x1c0] sm:$0xff]
    %v121 = vld [vmem:[#allocation5 + $0x1c8] sm:$0xff]
    %v122 = vld [vmem:[#allocation5 + $0x1d0] sm:$0xff]
    %v123 = vld [vmem:[#allocation5 + $0x1d8] sm:$0xff]
    %v124 = vld [vmem:[#allocation5 + $0x1e0] sm:$0xff]
    %v125 = vld [vmem:[#allocation5 + $0x1e8] sm:$0xff]
    %v126 = vld [vmem:[#allocation5 + $0x1f0] sm:$0xff]
    %v127 = vld [vmem:[#allocation5 + $0x1f8] sm:$0xff]
    %v128 = vld [vmem:[#allocation5 + $0x200] sm:$0xff]
    %v129 = vld [vmem:[#allocation5 + $0x208] sm:$0xff]
    %v130 = vld [vmem:[#allocation5 + $0x210] sm:$0xff]
    %v131 = vld [vmem:[#allocation5 + $0x218] sm:$0xff]
    %v132 = vld [vmem:[#allocation5 + $0x220] sm:$0xff]
    %v133 = vld [vmem:[#allocation5 + $0x228] sm:$0xff]
    %v134 = vld [vmem:[#allocation5 + $0x230] sm:$0xff]
    %v135 = vld [vmem:[#allocation5 + $0x238] sm:$0xff]
    %v136 = vld [vmem:[#allocation5 + $0x240] sm:$0xff]
    %v137 = vld [vmem:[#allocation5 + $0x248] sm:$0xff]
    %v138 = vld [vmem:[#allocation5 + $0x250] sm:$0xff]
    %v139 = vld [vmem:[#allocation5 + $0x258] sm:$0xff]
    %v140 = vld [vmem:[#allocation5 + $0x260] sm:$0xff]
    %v141 = vld [vmem:[#allocation5 + $0x268] sm:$0xff]
    %v142 = vld [vmem:[#allocation5 + $0x270] sm:$0xff]
    %v143 = vld [vmem:[#allocation5 + $0x278] sm:$0xff]
    %v144 = vld [vmem:[#allocation5 + $0x280] sm:$0xff]
    %v145 = vld [vmem:[#allocation5 + $0x288] sm:$0xff]
    %v146 = vld [vmem:[#allocation5 + $0x290] sm:$0xff]
    %v147 = vld [vmem:[#allocation5 + $0x298] sm:$0xff]
    %v148 = vld [vmem:[#allocation5 + $0x2a0] sm:$0xff]
    %v149 = vld [vmem:[#allocation5 + $0x2a8] sm:$0xff]
    %v150 = vld [vmem:[#allocation5 + $0x2b0] sm:$0xff]
    %v151 = vld [vmem:[#allocation5 + $0x2b8] sm:$0xff]
    %v152 = vld [vmem:[#allocation5 + $0x2c0] sm:$0xff]
    %v153 = vld [vmem:[#allocation5 + $0x2c8] sm:$0xff]
    %v154 = vld [vmem:[#allocation5 + $0x2d0] sm:$0xff]
    %v155 = vld [vmem:[#allocation5 + $0x2d8] sm:$0xff]
    %v156 = vld [vmem:[#allocation5 + $0x2e0] sm:$0xff]
    %v157 = vld [vmem:[#allocation5 + $0x2e8] sm:$0xff]
    %v158 = vld [vmem:[#allocation5 + $0x2f0] sm:$0xff]
    %v159 = vld [vmem:[#allocation5 + $0x2f8] sm:$0xff]
    %v160 = vld [vmem:[#allocation5 + $0x300] sm:$0xff]
    %v161 = vld [vmem:[#allocation5 + $0x308] sm:$0xff]
    %v162 = vld [vmem:[#allocation5 + $0x310] sm:$0xff]
    %v163 = vld [vmem:[#allocation5 + $0x318] sm:$0xff]
    %v164 = vld [vmem:[#allocation5 + $0x320] sm:$0xff]
    %v165 = vld [vmem:[#allocation5 + $0x328] sm:$0xff]
    %v166 = vld [vmem:[#allocation5 + $0x330] sm:$0xff]
    %v167 = vld [vmem:[#allocation5 + $0x338] sm:$0xff]
    %v168 = vld [vmem:[#allocation5 + $0x340] sm:$0xff]
    %v169 = vld [vmem:[#allocation5 + $0x348] sm:$0xff]
    %v170 = vld [vmem:[#allocation5 + $0x350] sm:$0xff]
    %v171 = vld [vmem:[#allocation5 + $0x358] sm:$0xff]
    %v172 = vld [vmem:[#allocation5 + $0x360] sm:$0xff]
    %v173 = vld [vmem:[#allocation5 + $0x368] sm:$0xff]
    %v174 = vld [vmem:[#allocation5 + $0x370] sm:$0xff]
    %v175 = vld [vmem:[#allocation5 + $0x378] sm:$0xff]
    %v176 = vld [vmem:[#allocation5 + $0x380] sm:$0xff]
    %v177 = vld [vmem:[#allocation5 + $0x388] sm:$0xff]
    %v178 = vld [vmem:[#allocation5 + $0x390] sm:$0xff]
    %v179 = vld [vmem:[#allocation5 + $0x398] sm:$0xff]
    %v180 = vld [vmem:[#allocation5 + $0x3a0] sm:$0xff]
    %v181 = vld [vmem:[#allocation5 + $0x3a8] sm:$0xff]
    %v182 = vld [vmem:[#allocation5 + $0x3b0] sm:$0xff]
    %v183 = vld [vmem:[#allocation5 + $0x3b8] sm:$0xff]
    %v184 = vld [vmem:[#allocation5 + $0x3c0] sm:$0xff]
    %v185 = vld [vmem:[#allocation5 + $0x3c8] sm:$0xff]
    %v186 = vld [vmem:[#allocation5 + $0x3d0] sm:$0xff]
    %v187 = vld [vmem:[#allocation5 + $0x3d8] sm:$0xff]
    %v188 = vld [vmem:[#allocation5 + $0x3e0] sm:$0xff]
    %v189 = vld [vmem:[#allocation5 + $0x3e8] sm:$0xff]
    %v190 = vld [vmem:[#allocation5 + $0x3f0] sm:$0xff]
    %v191 = vld [vmem:[#allocation5 + $0x3f8] sm:$0xff]
    %v192 = vld [vmem:[#allocation7] sm:$0xf]
    %v194 = vperm.slane %v192, 0
    %v195 = vperm.slane %v192, 1
    %v196 = vperm.slane %v192, 2
    %v197 = vperm.slane %v192, 3
    %202 = vmatpush.msra.mxu0 %v124
    %203 = vmatpush.msra.mxu0 %v120
    %204 = vmatpush.msra.mxu0 %v116
    %205 = vmatpush.msra.mxu0 %v112
    %206 = vmatpush.msra.mxu0 %v108
    %207 = vmatpush.msra.mxu0 %v104
    %208 = vmatpush.msra.mxu0 %v100
    %209 = vmatpush.msra.mxu0 %v96
    %210 = vmatpush.msra.mxu0 %v92
    %211 = vmatpush.msra.mxu0 %v88
    %212 = vmatpush.msra.mxu0 %v84
    %213 = vmatpush.msra.mxu0 %v80
    %214 = vmatpush.msra.mxu0 %v76
    %215 = vmatpush.msra.mxu0 %v72
    %216 = vmatpush.msra.mxu0 %v68
    %217 = vmatpush.msra.mxu0 %v64
    %218 = vmatmul.f32.gmra.mxu0 %v60
    %v219 = vpop.f32.mrf.mxu0
    %v220 = vadd.f32 %v194, %v219
    %221 = vmatmul.f32.gmra.mxu0 %v62
    %v222 = vpop.f32.mrf.mxu0
    %v223 = vadd.f32 %v194, %v222
    %224 = vdwg.mxu0
    %225 = vmatpush.msra.mxu0 %v188
    %226 = vmatpush.msra.mxu0 %v184
    %227 = vmatpush.msra.mxu0 %v180
    %228 = vmatpush.msra.mxu0 %v176
    %229 = vmatpush.msra.mxu0 %v172
    %230 = vmatpush.msra.mxu0 %v168
    %231 = vmatpush.msra.mxu0 %v164
    %232 = vmatpush.msra.mxu0 %v160
    %233 = vmatpush.msra.mxu0 %v156
    %234 = vmatpush.msra.mxu0 %v152
    %235 = vmatpush.msra.mxu0 %v148
    %236 = vmatpush.msra.mxu0 %v144
    %237 = vmatpush.msra.mxu0 %v140
    %238 = vmatpush.msra.mxu0 %v136
    %239 = vmatpush.msra.mxu0 %v132
    %240 = vmatpush.msra.mxu0 %v128
    %241 = vmatmul.f32.gmra.mxu0 %v61
    %v242 = vpop.f32.mrf.mxu0
    %v243 = vadd.f32 %v220, %v242
    %244 = vmatmul.f32.gmra.mxu0 %v63
    %v245 = vpop.f32.mrf.mxu0
    %v246 = vadd.f32 %v223, %v245
    %247 = vdwg.mxu0
    %248 = vmatpush.msra.mxu0 %v125
    %249 = vmatpush.msra.mxu0 %v121
    %250 = vmatpush.msra.mxu0 %v117
    %251 = vmatpush.msra.mxu0 %v113
    %252 = vmatpush.msra.mxu0 %v109
    %253 = vmatpush.msra.mxu0 %v105
    %254 = vmatpush.msra.mxu0 %v101
    %255 = vmatpush.msra.mxu0 %v97
    %256 = vmatpush.msra.mxu0 %v93
    %257 = vmatpush.msra.mxu0 %v89
    %258 = vmatpush.msra.mxu0 %v85
    %259 = vmatpush.msra.mxu0 %v81
    %260 = vmatpush.msra.mxu0 %v77
    %261 = vmatpush.msra.mxu0 %v73
    %262 = vmatpush.msra.mxu0 %v69
    %263 = vmatpush.msra.mxu0 %v65
    %264 = vmatmul.f32.gmra.mxu0 %v60
    %v265 = vpop.f32.mrf.mxu0
    %v266 = vadd.f32 %v195, %v265
    %267 = vmatmul.f32.gmra.mxu0 %v62
    %v268 = vpop.f32.mrf.mxu0
    %v269 = vadd.f32 %v195, %v268
    %270 = vdwg.mxu0
    %271 = vmatpush.msra.mxu0 %v189
    %272 = vmatpush.msra.mxu0 %v185
    %273 = vmatpush.msra.mxu0 %v181
    %274 = vmatpush.msra.mxu0 %v177
    %275 = vmatpush.msra.mxu0 %v173
    %276 = vmatpush.msra.mxu0 %v169
    %277 = vmatpush.msra.mxu0 %v165
    %278 = vmatpush.msra.mxu0 %v161
    %279 = vmatpush.msra.mxu0 %v157
    %280 = vmatpush.msra.mxu0 %v153
    %281 = vmatpush.msra.mxu0 %v149
    %282 = vmatpush.msra.mxu0 %v145
    %283 = vmatpush.msra.mxu0 %v141
    %284 = vmatpush.msra.mxu0 %v137
    %285 = vmatpush.msra.mxu0 %v133
    %286 = vmatpush.msra.mxu0 %v129
    %287 = vmatmul.f32.gmra.mxu0 %v61
    %v288 = vpop.f32.mrf.mxu0
    %v289 = vadd.f32 %v266, %v288
    %290 = vmatmul.f32.gmra.mxu0 %v63
    %v291 = vpop.f32.mrf.mxu0
    %v292 = vadd.f32 %v269, %v291
    %293 = vdwg.mxu0
    %294 = vmatpush.msra.mxu0 %v126
    %295 = vmatpush.msra.mxu0 %v122
    %296 = vmatpush.msra.mxu0 %v118
    %297 = vmatpush.msra.mxu0 %v114
    %298 = vmatpush.msra.mxu0 %v110
    %299 = vmatpush.msra.mxu0 %v106
    %300 = vmatpush.msra.mxu0 %v102
    %301 = vmatpush.msra.mxu0 %v98
    %302 = vmatpush.msra.mxu0 %v94
    %303 = vmatpush.msra.mxu0 %v90
    %304 = vmatpush.msra.mxu0 %v86
    %305 = vmatpush.msra.mxu0 %v82
    %306 = vmatpush.msra.mxu0 %v78
    %307 = vmatpush.msra.mxu0 %v74
    %308 = vmatpush.msra.mxu0 %v70
    %309 = vmatpush.msra.mxu0 %v66
    %310 = vmatmul.f32.gmra.mxu0 %v60
    %v311 = vpop.f32.mrf.mxu0
    %v312 = vadd.f32 %v196, %v311
    %313 = vmatmul.f32.gmra.mxu0 %v62
    %v314 = vpop.f32.mrf.mxu0
    %v315 = vadd.f32 %v196, %v314
    %316 = vdwg.mxu0
    %317 = vmatpush.msra.mxu0 %v190
    %318 = vmatpush.msra.mxu0 %v186
    %319 = vmatpush.msra.mxu0 %v182
    %320 = vmatpush.msra.mxu0 %v178
    %321 = vmatpush.msra.mxu0 %v174
    %322 = vmatpush.msra.mxu0 %v170
    %323 = vmatpush.msra.mxu0 %v166
    %324 = vmatpush.msra.mxu0 %v162
    %325 = vmatpush.msra.mxu0 %v158
    %326 = vmatpush.msra.mxu0 %v154
    %327 = vmatpush.msra.mxu0 %v150
    %328 = vmatpush.msra.mxu0 %v146
    %329 = vmatpush.msra.mxu0 %v142
    %330 = vmatpush.msra.mxu0 %v138
    %331 = vmatpush.msra.mxu0 %v134
    %332 = vmatpush.msra.mxu0 %v130
    %333 = vmatmul.f32.gmra.mxu0 %v61
    %v334 = vpop.f32.mrf.mxu0
    %v335 = vadd.f32 %v312, %v334
    %336 = vmatmul.f32.gmra.mxu0 %v63
    %v337 = vpop.f32.mrf.mxu0
    %v338 = vadd.f32 %v315, %v337
    %339 = vdwg.mxu0
    %340 = vmatpush.msra.mxu0 %v127
    %341 = vmatpush.msra.mxu0 %v123
    %342 = vmatpush.msra.mxu0 %v119
    %343 = vmatpush.msra.mxu0 %v115
    %344 = vmatpush.msra.mxu0 %v111
    %345 = vmatpush.msra.mxu0 %v107
    %346 = vmatpush.msra.mxu0 %v103
    %347 = vmatpush.msra.mxu0 %v99
    %348 = vmatpush.msra.mxu0 %v95
    %349 = vmatpush.msra.mxu0 %v91
    %350 = vmatpush.msra.mxu0 %v87
    %351 = vmatpush.msra.mxu0 %v83
    %352 = vmatpush.msra.mxu0 %v79
    %353 = vmatpush.msra.mxu0 %v75
    %354 = vmatpush.msra.mxu0 %v71
    %355 = vmatpush.msra.mxu0 %v67
    %356 = vmatmul.f32.gmra.mxu0 %v60
    %v357 = vpop.f32.mrf.mxu0
    %v358 = vadd.f32 %v197, %v357
    %359 = vmatmul.f32.gmra.mxu0 %v62
    %v360 = vpop.f32.mrf.mxu0
    %v361 = vadd.f32 %v197, %v360
    %362 = vdwg.mxu0
    %363 = vmatpush.msra.mxu0 %v191
    %364 = vmatpush.msra.mxu0 %v187
    %365 = vmatpush.msra.mxu0 %v183
    %366 = vmatpush.msra.mxu0 %v179
    %367 = vmatpush.msra.mxu0 %v175
    %368 = vmatpush.msra.mxu0 %v171
    %369 = vmatpush.msra.mxu0 %v167
    %370 = vmatpush.msra.mxu0 %v163
    %371 = vmatpush.msra.mxu0 %v159
    %372 = vmatpush.msra.mxu0 %v155
    %373 = vmatpush.msra.mxu0 %v151
    %374 = vmatpush.msra.mxu0 %v147
    %375 = vmatpush.msra.mxu0 %v143
    %376 = vmatpush.msra.mxu0 %v139
    %377 = vmatpush.msra.mxu0 %v135
    %378 = vmatpush.msra.mxu0 %v131
    %379 = vmatmul.f32.gmra.mxu0 %v61
    %v380 = vpop.f32.mrf.mxu0
    %v381 = vadd.f32 %v358, %v380
    %382 = vmatmul.f32.gmra.mxu0 %v63
    %v383 = vpop.f32.mrf.mxu0
    %v384 = vadd.f32 %v361, %v383
    %385 = vdwg.mxu0
    %386 = vst [vmem:[#allocation8] sm:$0xff] %v243
    %387 = vst [vmem:[#allocation8 + $0x8] sm:$0xff] %v289
    %388 = vst [vmem:[#allocation8 + $0x10] sm:$0xff] %v335
    %389 = vst [vmem:[#allocation8 + $0x18] sm:$0xff] %v381
    %390 = vst [vmem:[#allocation8 + $0x20] sm:$0xff] %v246
    %391 = vst [vmem:[#allocation8 + $0x28] sm:$0xff] %v292
    %392 = vst [vmem:[#allocation8 + $0x30] sm:$0xff] %v338
    %393 = vst [vmem:[#allocation8 + $0x38] sm:$0xff] %v384
    // Predicated region
    $region26: #{projection_layer.1} parent=1 // pred_check
      _
    $region27: #{projection_layer.1} parent=1 // pred_check_branch
      %395 = sbr.rel (0) target = $region29
    $region28: #{projection_layer.1} parent=1 // pred_region
      %397 = vsyncadd [#allocation4], 0
      %s398 = sshll.u32 [#allocation8], 4
      %s399 = int_to_ptr.vmem [resolvable:$true] %s398
      %s400 = sshll.u32 %s3, 4
      %s401 = int_to_ptr.hbm [resolvable:$true] %s400
      %406 = dma.vmem_to_hbm [thread:$0]  %s399, 1024, %s401, [#allocation4], 512, 512, 32
    $region29: #{projection_layer.1} parent=1 // pred_fallthru
      _
    // Predicated region
    $region30: #{projection_layer.1} parent=1 // pred_check
      _
    $region31: #{projection_layer.1} parent=1 // pred_check_branch
      %408 = sbr.rel (0) target = $region33
    $region32: #{projection_layer.1} parent=1 // pred_region
      %410 = dma.done [#allocation4], 1024
    $region33: #{projection_layer.1} parent=1 // pred_fallthru
      _
    %411 = vsyncpa [#allocation3], 1
    %412 = vsyncpa [#allocation6], 1
    %413 = vsyncpa [#allocation4], 1

</llo_original>
